<compile_context>
chip_gen: v7x
topology: tpu7x:2x2x1
jax: 0.10.0
libtpu: 0.0.40
codegen_flags: <defaults>
</compile_context>

<pallas_src>
import functools
import math

import jax
import jax.numpy as jnp
from jax.experimental import pallas as pl
from jax.experimental.pallas import tpu as pltpu  # noqa: F401  (kept for future tiling params)

_LANES = 128


def _round_up(x, m):
    return ((x + m - 1) // m) * m


def _full_spec(shape):
    # Tiny problem sizes: no grid, full-array blocks (allowed because
    # block_shape equals the full array dims).
    return pl.BlockSpec(shape, lambda: tuple(0 for _ in shape))


# ---------------------------------------------------------------------------
# Pallas kernels
# ---------------------------------------------------------------------------
def _contrastive_kernel(a1m1_ref, a1m2_ref, a2m1_ref, a2m2_ref,
                        we1_ref, be1_ref, we2_ref, be2_ref,
                        o11_ref, o12_ref, o21_ref, o22_ref):
    """Both augmentations x both modalities encoded in one body.

    x_am : [B, F_m] f32 (cast to bf16 in vregs right before the dot)
    we_m : [F_m, Dp] bf16 (cols >= D are zero -> lane-dense 128-wide output)
    be_m : [1, Dp]   f32 (pad cols zero)
    o_am : [B, Dp]   f32, full-width stores
    """
    we1 = we1_ref[...]
    we2 = we2_ref[...]
    be1 = be1_ref[...]
    be2 = be2_ref[...]
    o11_ref[...] = jnp.dot(a1m1_ref[...].astype(jnp.bfloat16), we1,
                           preferred_element_type=jnp.float32) + be1
    o12_ref[...] = jnp.dot(a1m2_ref[...].astype(jnp.bfloat16), we2,
                           preferred_element_type=jnp.float32) + be2
    o21_ref[...] = jnp.dot(a2m1_ref[...].astype(jnp.bfloat16), we1,
                           preferred_element_type=jnp.float32) + be1
    o22_ref[...] = jnp.dot(a2m2_ref[...].astype(jnp.bfloat16), we2,
                           preferred_element_type=jnp.float32) + be2


def _class_fused_kernel(x1_ref, x2_ref, we1_ref, be1_ref, we2_ref, be2_ref,
                        w1a_ref, w1b_ref, b1_ref, w2_ref, b2_ref, o_ref):
    """Fully fused classification path (encode mod1 + mod2, concat, 2-layer MLP).

    The modality concat falls out by splitting the classifier's first weight
    row-wise: h = f1 @ W1[:D] + f2 @ W1[D:2D] + b1 (all operands padded to
    128x128, zero pads), so no block-diagonal K padding is multiplied.
    """
    f1 = jnp.dot(x1_ref[...].astype(jnp.bfloat16), we1_ref[...],
                 preferred_element_type=jnp.float32) + be1_ref[...]
    f2 = jnp.dot(x2_ref[...].astype(jnp.bfloat16), we2_ref[...],
                 preferred_element_type=jnp.float32) + be2_ref[...]
    h = (jnp.dot(f1.astype(jnp.bfloat16), w1a_ref[...],
                 preferred_element_type=jnp.float32)
         + jnp.dot(f2.astype(jnp.bfloat16), w1b_ref[...],
                   preferred_element_type=jnp.float32)
         + b1_ref[...])
    # LeakyReLU (torch default negative_slope = 0.01): 2 VPU ops.
    h = jnp.maximum(h, 0.01 * h)
    o_ref[...] = jnp.dot(h.astype(jnp.bfloat16), w2_ref[...],
                         preferred_element_type=jnp.float32) + b2_ref[...]


# ---------------------------------------------------------------------------
# Jitted whole-path wrappers (single XLA program per path)
# ---------------------------------------------------------------------------
@functools.partial(jax.jit, static_argnames=("embedding_dim",))
def _contrastive_forward(we1, be1, we2, be2, a1m1, a1m2, a2m1, a2m2, *,
                         embedding_dim):
    B = a1m1.shape[0]
    x11 = a1m1.reshape(B, -1)   # [B, F1] f32 (reshape only, no copy)
    x12 = a1m2.reshape(B, -1)   # [B, F2]
    x21 = a2m1.reshape(B, -1)
    x22 = a2m2.reshape(B, -1)
    F1 = x11.shape[1]
    F2 = x12.shape[1]
    Dp = we1.shape[1]
    out_sds = jax.ShapeDtypeStruct((B, Dp), jnp.float32)
    o11, o12, o21, o22 = pl.pallas_call(
        _contrastive_kernel,
        out_shape=(out_sds, out_sds, out_sds, out_sds),
        in_specs=[_full_spec((B, F1)), _full_spec((B, F2)),
                  _full_spec((B, F1)), _full_spec((B, F2)),
                  _full_spec((F1, Dp)), _full_spec((1, Dp)),
                  _full_spec((F2, Dp)), _full_spec((1, Dp))],
        out_specs=tuple(_full_spec((B, Dp)) for _ in range(4)),
    )(x11, x12, x21, x22, we1, be1, we2, be2)
    D = embedding_dim
    feats1 = (o11[:, :D], o12[:, :D])
    feats2 = (o21[:, :D], o22[:, :D])
    return feats1, feats2


@functools.partial(jax.jit, static_argnames=("num_classes",))
def _class_forward(we1, be1, we2, be2, w1a, w1b, b1, w2, b2, a1m1, a1m2, *,
                   num_classes):
    B = a1m1.shape[0]
    x1 = a1m1.reshape(B, -1)
    x2 = a1m2.reshape(B, -1)
    F1 = x1.shape[1]
    F2 = x2.shape[1]
    Dp = we1.shape[1]
    Hp = w1a.shape[1]
    Cp = w2.shape[1]
    logits_pad = pl.pallas_call(
        _class_fused_kernel,
        out_shape=jax.ShapeDtypeStruct((B, Cp), jnp.float32),
        in_specs=[
            _full_spec((B, F1)), _full_spec((B, F2)),
            _full_spec((F1, Dp)), _full_spec((1, Dp)),
            _full_spec((F2, Dp)), _full_spec((1, Dp)),
            _full_spec((Dp, Hp)), _full_spec((Dp, Hp)), _full_spec((1, Hp)),
            _full_spec((Hp, Cp)), _full_spec((1, Cp)),
        ],
        out_specs=_full_spec((B, Cp)),
    )(x1, x2, we1, be1, we2, be2, w1a, w1b, b1, w2, b2)
    return logits_pad[:, :num_classes]


# ---------------------------------------------------------------------------
# FOCAL module (JAX wrapper)
# ---------------------------------------------------------------------------
class FOCALPallas:
    def __init__(self, modalities, input_dims, embedding_dim, num_classes, key):
        assert len(modalities) == 2, "FOCAL forward signature assumes 2 modalities"
        self.modalities = list(modalities)
        self.n_mod = len(self.modalities)
        self.embedding_dim = embedding_dim
        self.num_classes = num_classes

        D = embedding_dim
        self.d_pad = _round_up(D, _LANES)           # per-modality feature lanes
        self.h_pad = _round_up(D, _LANES)           # classifier hidden lanes
        self.out_cols = _round_up(num_classes, _LANES)

        keys = jax.random.split(key, 2 * self.n_mod + 4)
        ki = 0

        # Per-modality linear encoders (no block-diagonal packing): the zero
        # column pads only make the output lane-dense; they do not scale with F.
        enc_w, enc_b = [], []
        for mod in self.modalities:
            Fm = input_dims[mod]
            scale = 1.0 / math.sqrt(Fm)
            w = jax.random.uniform(keys[ki], (Fm, D), jnp.float32,
                                   -scale, scale); ki += 1
            b = jax.random.uniform(keys[ki], (1, D), jnp.float32,
                                   -scale, scale); ki += 1
            w_pad = jnp.zeros((Fm, self.d_pad), jnp.float32).at[:, :D].set(w)
            b_pad = jnp.zeros((1, self.d_pad), jnp.float32).at[:, :D].set(b)
            enc_w.append(w_pad.astype(jnp.bfloat16))   # bf16 MXU operand
            enc_b.append(b_pad)                         # f32 bias
        self.w_e1, self.w_e2 = enc_w
        self.b_e1, self.b_e2 = enc_b

        # Classifier: Linear(2D, D) -> LeakyReLU -> Linear(D, C).
        # W1 split row-wise per modality so the concat is implicit; hidden and
        # logit widths padded to 128 lanes with exact-zero pads.
        s1 = 1.0 / math.sqrt(2 * D)
        w1 = jax.random.uniform(keys[ki], (2 * D, D), jnp.float32, -s1, s1); ki += 1
        b1 = jax.random.uniform(keys[ki], (1, D), jnp.float32, -s1, s1); ki += 1
        s2 = 1.0 / math.sqrt(D)
        w2 = jax.random.uniform(keys[ki], (D, num_classes), jnp.float32,
                                -s2, s2); ki += 1
        b2 = jax.random.uniform(keys[ki], (1, num_classes), jnp.float32,
                                -s2, s2); ki += 1

        self.w_cls1a = (jnp.zeros((self.d_pad, self.h_pad), jnp.float32)
                        .at[:D, :D].set(w1[:D, :])).astype(jnp.bfloat16)
        self.w_cls1b = (jnp.zeros((self.d_pad, self.h_pad), jnp.float32)
                        .at[:D, :D].set(w1[D:, :])).astype(jnp.bfloat16)
        self.b_cls1 = jnp.zeros((1, self.h_pad), jnp.float32).at[:, :D].set(b1)
        self.w_cls2 = (jnp.zeros((self.h_pad, self.out_cols), jnp.float32)
                       .at[:D, :num_classes].set(w2)).astype(jnp.bfloat16)
        self.b_cls2 = (jnp.zeros((1, self.out_cols), jnp.float32)
                       .at[:, :num_classes].set(b2))

    def forward(self, aug1_mod1, aug1_mod2, aug2_mod1, aug2_mod2,
                proj_head=True, class_head=False):
        if class_head:
            # The reference discards aug2 features on this path, so the second
            # backbone pass is skipped entirely (identical returned logits).
            return _class_forward(self.w_e1, self.b_e1, self.w_e2, self.b_e2,
                                  self.w_cls1a, self.w_cls1b, self.b_cls1,
                                  self.w_cls2, self.b_cls2,
                                  aug1_mod1, aug1_mod2,
                                  num_classes=self.num_classes)
        feats1, feats2 = _contrastive_forward(
            self.w_e1, self.b_e1, self.w_e2, self.b_e2,
            aug1_mod1, aug1_mod2, aug2_mod1, aug2_mod2,
            embedding_dim=self.embedding_dim)
        mod_features1 = {m: feats1[i] for i, m in enumerate(self.modalities)}
        mod_features2 = {m: feats2[i] for i, m in enumerate(self.modalities)}
        return mod_features1, mod_features2


# ---------------------------------------------------------------------------
# Pure-JAX reference (same bf16/f32 math) for a light correctness check
# ---------------------------------------------------------------------------
def _ref_encode_mod(w_pad_bf16, b_pad, x):
    B = x.shape[0]
    xf = x.reshape(B, -1).astype(jnp.bfloat16)
    return jnp.dot(xf, w_pad_bf16, preferred_element_type=jnp.float32) + b_pad


def _ref_class(model, xm1, xm2):
    f1 = _ref_encode_mod(model.w_e1, model.b_e1, xm1)
    f2 = _ref_encode_mod(model.w_e2, model.b_e2, xm2)
    h = (jnp.dot(f1.astype(jnp.bfloat16), model.w_cls1a,
                 preferred_element_type=jnp.float32)
         + jnp.dot(f2.astype(jnp.bfloat16), model.w_cls1b,
                   preferred_element_type=jnp.float32)
         + model.b_cls1)
    h = jnp.maximum(h, 0.01 * h)
    logit = jnp.dot(h.astype(jnp.bfloat16), model.w_cls2,
                    preferred_element_type=jnp.float32) + model.b_cls2
    return logit[:, :model.num_classes]


# ---------------------------------------------------------------------------
# Demo
# ---------------------------------------------------------------------------
if __name__ == "__main__":
    key = jax.random.PRNGKey(0)
    k_model, k1, k2, k3, k4 = jax.random.split(key, 5)

    B = 2
    # modality 1: NCHW [2, 4, 8, 8] -> F1 = 256
    # modality 2: NCHW [2, 6, 8, 8] -> F2 = 384
    aug1_mod1 = jax.random.normal(k1, (B, 4, 8, 8), jnp.float32)
    aug1_mod2 = jax.random.normal(k2, (B, 6, 8, 8), jnp.float32)
    aug2_mod1 = jax.random.normal(k3, (B, 4, 8, 8), jnp.float32)
    aug2_mod2 = jax.random.normal(k4, (B, 6, 8, 8), jnp.float32)

    modalities = ("mod1", "mod2")
    input_dims = {"mod1": 4 * 8 * 8, "mod2": 6 * 8 * 8}
    embedding_dim = 32
    num_classes = 8

    model = FOCALPallas(modalities, input_dims, embedding_dim, num_classes,
                        k_model)

    # contrastive path: returns (mod_features1, mod_features2) dicts
    mod_features1, mod_features2 = model.forward(
        aug1_mod1, aug1_mod2, aug2_mod1, aug2_mod2,
        proj_head=True, class_head=False)
    for d in (mod_features1, mod_features2):
        for mod in modalities:
            jax.block_until_ready(d[mod])
            assert d[mod].shape == (B, embedding_dim)

    # reference check (same bf16 matmul / f32 accumulate math)
    D = embedding_dim
    ref11 = _ref_encode_mod(model.w_e1, model.b_e1, aug1_mod1)[:, :D]
    ref12 = _ref_encode_mod(model.w_e2, model.b_e2, aug1_mod2)[:, :D]
    ref21 = _ref_encode_mod(model.w_e1, model.b_e1, aug2_mod1)[:, :D]
    ref22 = _ref_encode_mod(model.w_e2, model.b_e2, aug2_mod2)[:, :D]
    assert jnp.allclose(mod_features1["mod1"], ref11, rtol=2e-2, atol=2e-2)
    assert jnp.allclose(mod_features1["mod2"], ref12, rtol=2e-2, atol=2e-2)
    assert jnp.allclose(mod_features2["mod1"], ref21, rtol=2e-2, atol=2e-2)
    assert jnp.allclose(mod_features2["mod2"], ref22, rtol=2e-2, atol=2e-2)

    # classification path: fused encode + implicit concat + classifier MLP
    logits = model.forward(
        aug1_mod1, aug1_mod2, aug2_mod1, aug2_mod2,
        proj_head=True, class_head=True)
    jax.block_until_ready(logits)
    assert logits.shape == (B, num_classes)
    assert jnp.allclose(logits, _ref_class(model, aug1_mod1, aug1_mod2),
                        rtol=2e-2, atol=2e-2)

    print("KERNEL_OK")
</pallas_src>

<mosaic_0001>
module attributes {stable_mosaic.version = 11 : i64} {
  func.func @_contrastive_kernel(%arg0: memref<2x256xf32, #tpu.memory_space<vmem>>, %arg1: memref<2x384xf32, #tpu.memory_space<vmem>>, %arg2: memref<2x256xf32, #tpu.memory_space<vmem>>, %arg3: memref<2x384xf32, #tpu.memory_space<vmem>>, %arg4: memref<256x128xbf16, #tpu.memory_space<vmem>>, %arg5: memref<1x128xf32, #tpu.memory_space<vmem>>, %arg6: memref<384x128xbf16, #tpu.memory_space<vmem>>, %arg7: memref<1x128xf32, #tpu.memory_space<vmem>>, %arg8: memref<2x128xf32, #tpu.memory_space<vmem>>, %arg9: memref<2x128xf32, #tpu.memory_space<vmem>>, %arg10: memref<2x128xf32, #tpu.memory_space<vmem>>, %arg11: memref<2x128xf32, #tpu.memory_space<vmem>>) attributes {dimension_semantics = [], scalar_prefetch = 0 : i64, scratch_operands = 0 : i64, tpu.core_type = #tpu.core_type<tc>} {
    %c0 = arith.constant 0 : index
    %c0_0 = arith.constant 0 : index
    %0 = vector.load %arg4[%c0, %c0_0] : memref<256x128xbf16, #tpu.memory_space<vmem>>, vector<256x128xbf16>
    %c0_1 = arith.constant 0 : index
    %c0_2 = arith.constant 0 : index
    %1 = vector.load %arg6[%c0_1, %c0_2] : memref<384x128xbf16, #tpu.memory_space<vmem>>, vector<384x128xbf16>
    %c0_3 = arith.constant 0 : index
    %c0_4 = arith.constant 0 : index
    %2 = vector.load %arg5[%c0_3, %c0_4] : memref<1x128xf32, #tpu.memory_space<vmem>>, vector<1x128xf32>
    %c0_5 = arith.constant 0 : index
    %c0_6 = arith.constant 0 : index
    %3 = vector.load %arg7[%c0_5, %c0_6] : memref<1x128xf32, #tpu.memory_space<vmem>>, vector<1x128xf32>
    %c0_7 = arith.constant 0 : index
    %c0_8 = arith.constant 0 : index
    %4 = vector.load %arg0[%c0_7, %c0_8] : memref<2x256xf32, #tpu.memory_space<vmem>>, vector<2x256xf32>
    %5 = arith.truncf %4 : vector<2x256xf32> to vector<2x256xbf16>
    %cst = arith.constant dense<0.000000e+00> : vector<2x128xf32>
    %6 = tpu.matmul %5, %0, %cst {dimension_numbers = #tpu.dot_dimension_numbers<[1], [0], [0], [1], [0, 0, 1, 1], [], []>} : vector<2x256xbf16>, vector<256x128xbf16>, vector<2x128xf32> -> vector<2x128xf32>
    %7 = vector.broadcast %2 : vector<1x128xf32> to vector<2x128xf32>
    %8 = arith.addf %6, %7 : vector<2x128xf32>
    %c0_9 = arith.constant 0 : index
    %c0_10 = arith.constant 0 : index
    %9 = vector.load %arg8[%c0_9, %c0_10] : memref<2x128xf32, #tpu.memory_space<vmem>>, vector<2x128xf32>
    tpu.vector_store %arg8[%c0_9, %c0_10], %8 {strides = array<i32>} : memref<2x128xf32, #tpu.memory_space<vmem>>, vector<2x128xf32>,
    %c0_11 = arith.constant 0 : index
    %c0_12 = arith.constant 0 : index
    %10 = vector.load %arg1[%c0_11, %c0_12] : memref<2x384xf32, #tpu.memory_space<vmem>>, vector<2x384xf32>
    %11 = arith.truncf %10 : vector<2x384xf32> to vector<2x384xbf16>
    %cst_13 = arith.constant dense<0.000000e+00> : vector<2x128xf32>
    %12 = tpu.matmul %11, %1, %cst_13 {dimension_numbers = #tpu.dot_dimension_numbers<[1], [0], [0], [1], [0, 0, 1, 1], [], []>} : vector<2x384xbf16>, vector<384x128xbf16>, vector<2x128xf32> -> vector<2x128xf32>
    %13 = vector.broadcast %3 : vector<1x128xf32> to vector<2x128xf32>
    %14 = arith.addf %12, %13 : vector<2x128xf32>
    %c0_14 = arith.constant 0 : index
    %c0_15 = arith.constant 0 : index
    %15 = vector.load %arg9[%c0_14, %c0_15] : memref<2x128xf32, #tpu.memory_space<vmem>>, vector<2x128xf32>
    tpu.vector_store %arg9[%c0_14, %c0_15], %14 {strides = array<i32>} : memref<2x128xf32, #tpu.memory_space<vmem>>, vector<2x128xf32>,
    %c0_16 = arith.constant 0 : index
    %c0_17 = arith.constant 0 : index
    %16 = vector.load %arg2[%c0_16, %c0_17] : memref<2x256xf32, #tpu.memory_space<vmem>>, vector<2x256xf32>
    %17 = arith.truncf %16 : vector<2x256xf32> to vector<2x256xbf16>
    %cst_18 = arith.constant dense<0.000000e+00> : vector<2x128xf32>
    %18 = tpu.matmul %17, %0, %cst_18 {dimension_numbers = #tpu.dot_dimension_numbers<[1], [0], [0], [1], [0, 0, 1, 1], [], []>} : vector<2x256xbf16>, vector<256x128xbf16>, vector<2x128xf32> -> vector<2x128xf32>
    %19 = vector.broadcast %2 : vector<1x128xf32> to vector<2x128xf32>
    %20 = arith.addf %18, %19 : vector<2x128xf32>
    %c0_19 = arith.constant 0 : index
    %c0_20 = arith.constant 0 : index
    %21 = vector.load %arg10[%c0_19, %c0_20] : memref<2x128xf32, #tpu.memory_space<vmem>>, vector<2x128xf32>
    tpu.vector_store %arg10[%c0_19, %c0_20], %20 {strides = array<i32>} : memref<2x128xf32, #tpu.memory_space<vmem>>, vector<2x128xf32>,
    %c0_21 = arith.constant 0 : index
    %c0_22 = arith.constant 0 : index
    %22 = vector.load %arg3[%c0_21, %c0_22] : memref<2x384xf32, #tpu.memory_space<vmem>>, vector<2x384xf32>
    %23 = arith.truncf %22 : vector<2x384xf32> to vector<2x384xbf16>
    %cst_23 = arith.constant dense<0.000000e+00> : vector<2x128xf32>
    %24 = tpu.matmul %23, %1, %cst_23 {dimension_numbers = #tpu.dot_dimension_numbers<[1], [0], [0], [1], [0, 0, 1, 1], [], []>} : vector<2x384xbf16>, vector<384x128xbf16>, vector<2x128xf32> -> vector<2x128xf32>
    %25 = vector.broadcast %3 : vector<1x128xf32> to vector<2x128xf32>
    %26 = arith.addf %24, %25 : vector<2x128xf32>
    %c0_24 = arith.constant 0 : index
    %c0_25 = arith.constant 0 : index
    %27 = vector.load %arg11[%c0_24, %c0_25] : memref<2x128xf32, #tpu.memory_space<vmem>>, vector<2x128xf32>
    tpu.vector_store %arg11[%c0_24, %c0_25], %26 {strides = array<i32>} : memref<2x128xf32, #tpu.memory_space<vmem>>, vector<2x128xf32>,
    return
  }
}

</mosaic_0001>

<llo_original>
// kernel: _contrastive_forward.1
$region0: #{_contrastive_forward.1}
  #allocation0 [shape = 'u32[]', space=smem, size = 0x4, offset = 0x4, fixed_abs, tag = 'smem constant byte address 0x4 - core index']
  #allocation1 [shape = 'u32[144,128]{1,0:T(1,128)}', space=vmem, size = 0x12000, scoped, tag = 'internal scratch']
  %s0 = inlined_call_operand.vmem [shape: f32[2,256], index: 0, kind: input, shape index: {}]
  %s1 = inlined_call_operand.vmem [shape: f32[2,384], index: 1, kind: input, shape index: {}]
  %s2 = inlined_call_operand.vmem [shape: f32[2,256], index: 2, kind: input, shape index: {}]
  %s3 = inlined_call_operand.vmem [shape: f32[2,384], index: 3, kind: input, shape index: {}]
  %s4 = inlined_call_operand.vmem [shape: bf16[256,128], index: 4, kind: input, shape index: {}]
  %s5 = inlined_call_operand.vmem [shape: f32[1,128], index: 5, kind: input, shape index: {}]
  %s6 = inlined_call_operand.vmem [shape: bf16[384,128], index: 6, kind: input, shape index: {}]
  %s7 = inlined_call_operand.vmem [shape: f32[1,128], index: 7, kind: input, shape index: {}]
  %s8 = inlined_call_operand.hbm [shape: f32[2,128], index: 8, kind: output, shape index: {0}]
  %s9 = inlined_call_operand.hbm [shape: f32[2,128], index: 9, kind: output, shape index: {1}]
  %s10 = inlined_call_operand.hbm [shape: f32[2,128], index: 10, kind: output, shape index: {2}]
  %s11 = inlined_call_operand.hbm [shape: f32[2,128], index: 11, kind: output, shape index: {3}]
  %12 = xla_tuple %s8, %s9, %s10, %s11
  %s13 = sld [smem:[#allocation0]]
  $region66: #{_contrastive_forward.1} parent=0
    _
  %s15 = ssub.s32 1, %s13
  %s16 = scalar_select 0, %s15, %s13
  $region1: #{_contrastive_forward.1} parent=0
    #allocation2 [shape = 'u8[1024]{0}', space=vmem, size = 0x400, scoped, tag = 'output window, operand 0, single buffered']
    #allocation3 [shape = 's32[1]{0}', space=sflag, size = 0x4, scoped, tag = 'scoped memory for _contrastive_forward.1']
    #allocation4 [shape = 'u8[1024]{0}', space=vmem, size = 0x400, scoped, tag = 'output window, operand 1, single buffered']
    #allocation5 [shape = 's32[1]{0}', space=sflag, size = 0x4, scoped, tag = 'scoped memory for _contrastive_forward.1']
    #allocation6 [shape = 'u8[1024]{0}', space=vmem, size = 0x400, scoped, tag = 'output window, operand 2, single buffered']
    #allocation7 [shape = 'u8[1024]{0}', space=vmem, size = 0x400, scoped, tag = 'output window, operand 3, single buffered']
    #allocation8 [shape = 's32[1]{0}', space=sflag, size = 0x4, scoped, tag = 'scoped memory for _contrastive_forward.1']
    %17 = vsyncpa [#allocation3], 0
    %18 = vsyncpa [#allocation5], 0
    %19 = vsyncpa [#allocation8], 0
    // Predicated region
    $region2: #{_contrastive_forward.1} parent=1 // pred_check
      _
    $region3: #{_contrastive_forward.1} parent=1 // pred_check_branch
      %21 = sbr.rel (0) target = $region5
    $region4: #{_contrastive_forward.1} parent=1 // pred_region
      _
    $region5: #{_contrastive_forward.1} parent=1 // pred_fallthru
      _
    // Predicated region
    $region6: #{_contrastive_forward.1} parent=1 // pred_check
      _
    $region7: #{_contrastive_forward.1} parent=1 // pred_check_branch
      %23 = sbr.rel (0) target = $region9
    $region8: #{_contrastive_forward.1} parent=1 // pred_region
      _
    $region9: #{_contrastive_forward.1} parent=1 // pred_fallthru
      _
    // Predicated region
    $region10: #{_contrastive_forward.1} parent=1 // pred_check
      _
    $region11: #{_contrastive_forward.1} parent=1 // pred_check_branch
      %25 = sbr.rel (0) target = $region13
    $region12: #{_contrastive_forward.1} parent=1 // pred_region
      _
    $region13: #{_contrastive_forward.1} parent=1 // pred_fallthru
      _
    // Predicated region
    $region14: #{_contrastive_forward.1} parent=1 // pred_check
      _
    $region15: #{_contrastive_forward.1} parent=1 // pred_check_branch
      %27 = sbr.rel (0) target = $region17
    $region16: #{_contrastive_forward.1} parent=1 // pred_region
      _
    $region17: #{_contrastive_forward.1} parent=1 // pred_fallthru
      _
    // Predicated region
    $region18: #{_contrastive_forward.1} parent=1 // pred_check
      _
    $region19: #{_contrastive_forward.1} parent=1 // pred_check_branch
      %29 = sbr.rel (0) target = $region21
    $region20: #{_contrastive_forward.1} parent=1 // pred_region
      _
    $region21: #{_contrastive_forward.1} parent=1 // pred_fallthru
      _
    // Predicated region
    $region22: #{_contrastive_forward.1} parent=1 // pred_check
      _
    $region23: #{_contrastive_forward.1} parent=1 // pred_check_branch
      %31 = sbr.rel (0) target = $region25
    $region24: #{_contrastive_forward.1} parent=1 // pred_region
      _
    $region25: #{_contrastive_forward.1} parent=1 // pred_fallthru
      _
    // Predicated region
    $region26: #{_contrastive_forward.1} parent=1 // pred_check
      _
    $region27: #{_contrastive_forward.1} parent=1 // pred_check_branch
      %33 = sbr.rel (0) target = $region29
    $region28: #{_contrastive_forward.1} parent=1 // pred_region
      _
    $region29: #{_contrastive_forward.1} parent=1 // pred_fallthru
      _
    // Predicated region
    $region30: #{_contrastive_forward.1} parent=1 // pred_check
      _
    $region31: #{_contrastive_forward.1} parent=1 // pred_check_branch
      %35 = sbr.rel (0) target = $region33
    $region32: #{_contrastive_forward.1} parent=1 // pred_region
      _
    $region33: #{_contrastive_forward.1} parent=1 // pred_fallthru
      _
    %v37 = vld [vmem:[%s4] sm:$0xf]
    %v38 = vld [vmem:[%s4 + $0x4] sm:$0xf]
    %v39 = vld [vmem:[%s4 + $0x8] sm:$0xf]
    %v40 = vld [vmem:[%s4 + $0xc] sm:$0xf]
    %v41 = vld [vmem:[%s4 + $0x10] sm:$0xf]
    %v42 = vld [vmem:[%s4 + $0x14] sm:$0xf]
    %v43 = vld [vmem:[%s4 + $0x18] sm:$0xf]
    %v44 = vld [vmem:[%s4 + $0x1c] sm:$0xf]
    %v45 = vld [vmem:[%s4 + $0x20] sm:$0xf]
    %v46 = vld [vmem:[%s4 + $0x24] sm:$0xf]
    %v47 = vld [vmem:[%s4 + $0x28] sm:$0xf]
    %v48 = vld [vmem:[%s4 + $0x2c] sm:$0xf]
    %v49 = vld [vmem:[%s4 + $0x30] sm:$0xf]
    %v50 = vld [vmem:[%s4 + $0x34] sm:$0xf]
    %v51 = vld [vmem:[%s4 + $0x38] sm:$0xf]
    %v52 = vld [vmem:[%s4 + $0x3c] sm:$0xf]
    %v53 = vld [vmem:[%s4 + $0x40] sm:$0xf]
    %v54 = vld [vmem:[%s4 + $0x44] sm:$0xf]
    %v55 = vld [vmem:[%s4 + $0x48] sm:$0xf]
    %v56 = vld [vmem:[%s4 + $0x4c] sm:$0xf]
    %v57 = vld [vmem:[%s4 + $0x50] sm:$0xf]
    %v58 = vld [vmem:[%s4 + $0x54] sm:$0xf]
    %v59 = vld [vmem:[%s4 + $0x58] sm:$0xf]
    %v60 = vld [vmem:[%s4 + $0x5c] sm:$0xf]
    %v61 = vld [vmem:[%s4 + $0x60] sm:$0xf]
    %v62 = vld [vmem:[%s4 + $0x64] sm:$0xf]
    %v63 = vld [vmem:[%s4 + $0x68] sm:$0xf]
    %v64 = vld [vmem:[%s4 + $0x6c] sm:$0xf]
    %v65 = vld [vmem:[%s4 + $0x70] sm:$0xf]
    %v66 = vld [vmem:[%s4 + $0x74] sm:$0xf]
    %v67 = vld [vmem:[%s4 + $0x78] sm:$0xf]
    %v68 = vld [vmem:[%s4 + $0x7c] sm:$0xf]
    %v69 = vld [vmem:[%s6] sm:$0xf]
    %v70 = vld [vmem:[%s6 + $0x4] sm:$0xf]
    %v71 = vld [vmem:[%s6 + $0x8] sm:$0xf]
    %v72 = vld [vmem:[%s6 + $0xc] sm:$0xf]
    %v73 = vld [vmem:[%s6 + $0x10] sm:$0xf]
    %v74 = vld [vmem:[%s6 + $0x14] sm:$0xf]
    %v75 = vld [vmem:[%s6 + $0x18] sm:$0xf]
    %v76 = vld [vmem:[%s6 + $0x1c] sm:$0xf]
    %v77 = vld [vmem:[%s6 + $0x20] sm:$0xf]
    %v78 = vld [vmem:[%s6 + $0x24] sm:$0xf]
    %v79 = vld [vmem:[%s6 + $0x28] sm:$0xf]
    %v80 = vld [vmem:[%s6 + $0x2c] sm:$0xf]
    %v81 = vld [vmem:[%s6 + $0x30] sm:$0xf]
    %v82 = vld [vmem:[%s6 + $0x34] sm:$0xf]
    %v83 = vld [vmem:[%s6 + $0x38] sm:$0xf]
    %v84 = vld [vmem:[%s6 + $0x3c] sm:$0xf]
    %v85 = vld [vmem:[%s6 + $0x40] sm:$0xf]
    %v86 = vld [vmem:[%s6 + $0x44] sm:$0xf]
    %v87 = vld [vmem:[%s6 + $0x48] sm:$0xf]
    %v88 = vld [vmem:[%s6 + $0x4c] sm:$0xf]
    %v89 = vld [vmem:[%s6 + $0x50] sm:$0xf]
    %v90 = vld [vmem:[%s6 + $0x54] sm:$0xf]
    %v91 = vld [vmem:[%s6 + $0x58] sm:$0xf]
    %v92 = vld [vmem:[%s6 + $0x5c] sm:$0xf]
    %v93 = vld [vmem:[%s6 + $0x60] sm:$0xf]
    %v94 = vld [vmem:[%s6 + $0x64] sm:$0xf]
    %v95 = vld [vmem:[%s6 + $0x68] sm:$0xf]
    %v96 = vld [vmem:[%s6 + $0x6c] sm:$0xf]
    %v97 = vld [vmem:[%s6 + $0x70] sm:$0xf]
    %v98 = vld [vmem:[%s6 + $0x74] sm:$0xf]
    %v99 = vld [vmem:[%s6 + $0x78] sm:$0xf]
    %v100 = vld [vmem:[%s6 + $0x7c] sm:$0xf]
    %v101 = vld [vmem:[%s6 + $0x80] sm:$0xf]
    %v102 = vld [vmem:[%s6 + $0x84] sm:$0xf]
    %v103 = vld [vmem:[%s6 + $0x88] sm:$0xf]
    %v104 = vld [vmem:[%s6 + $0x8c] sm:$0xf]
    %v105 = vld [vmem:[%s6 + $0x90] sm:$0xf]
    %v106 = vld [vmem:[%s6 + $0x94] sm:$0xf]
    %v107 = vld [vmem:[%s6 + $0x98] sm:$0xf]
    %v108 = vld [vmem:[%s6 + $0x9c] sm:$0xf]
    %v109 = vld [vmem:[%s6 + $0xa0] sm:$0xf]
    %v110 = vld [vmem:[%s6 + $0xa4] sm:$0xf]
    %v111 = vld [vmem:[%s6 + $0xa8] sm:$0xf]
    %v112 = vld [vmem:[%s6 + $0xac] sm:$0xf]
    %v113 = vld [vmem:[%s6 + $0xb0] sm:$0xf]
    %v114 = vld [vmem:[%s6 + $0xb4] sm:$0xf]
    %v115 = vld [vmem:[%s6 + $0xb8] sm:$0xf]
    %v116 = vld [vmem:[%s6 + $0xbc] sm:$0xf]
    %v117 = vld [vmem:[%s5] sm:$0x1]
    %v118 = vld [vmem:[%s7] sm:$0x1]
    %v119 = vld [vmem:[%s0] sm:$0xf]
    %v122 = vunpack.c.l.s4 1983009808
    %v123 = vunpack.c.0.s8 %v122
    %v124 = vlaneseq
    %v125 = vshrl.u32 %v124, 7
    %v126 = vsub.s32 %v123, %v125
    %v127 = vrot.slane %v119, %v126
    %v128 = vcombine.high %v127, %v127
    %v131 = vpack.c.bf16 %v127, %v127
    %v132 = vpack.c.bf16 %v128, %v128
    %v134 = vlaneseq
    %v135 = vshrl.u32 %v134, 7
    %v136 = vsub.s32 0, %v135
    %v137 = vrot.slane %v117, %v136
    %v171 = vunpack.c.l.b16 %v37
    %v172 = vunpack.c.l.b16 %v38
    %v173 = vunpack.c.l.b16 %v39
    %v174 = vunpack.c.l.b16 %v40
    %v175 = vunpack.c.l.b16 %v41
    %v176 = vunpack.c.l.b16 %v42
    %v177 = vunpack.c.l.b16 %v43
    %v178 = vunpack.c.l.b16 %v44
    %v179 = vunpack.c.l.b16 %v45
    %v180 = vunpack.c.l.b16 %v46
    %v181 = vunpack.c.l.b16 %v47
    %v182 = vunpack.c.l.b16 %v48
    %v183 = vunpack.c.l.b16 %v49
    %v184 = vunpack.c.l.b16 %v50
    %v185 = vunpack.c.l.b16 %v51
    %v186 = vunpack.c.l.b16 %v52
    %v187 = vunpack.c.l.b16 %v53
    %v188 = vunpack.c.l.b16 %v54
    %v189 = vunpack.c.l.b16 %v55
    %v190 = vunpack.c.l.b16 %v56
    %v191 = vunpack.c.l.b16 %v57
    %v192 = vunpack.c.l.b16 %v58
    %v193 = vunpack.c.l.b16 %v59
    %v194 = vunpack.c.l.b16 %v60
    %v195 = vunpack.c.l.b16 %v61
    %v196 = vunpack.c.l.b16 %v62
    %v197 = vunpack.c.l.b16 %v63
    %v198 = vunpack.c.l.b16 %v64
    %v199 = vunpack.c.l.b16 %v65
    %v200 = vunpack.c.l.b16 %v66
    %v201 = vunpack.c.l.b16 %v67
    %v202 = vunpack.c.l.b16 %v68
    %v203 = vpack.c.b16 %v172, %v171
    %v204 = vpack.c.b16 %v174, %v173
    %v205 = vpack.c.b16 %v176, %v175
    %v206 = vpack.c.b16 %v178, %v177
    %v207 = vpack.c.b16 %v180, %v179
    %v208 = vpack.c.b16 %v182, %v181
    %v209 = vpack.c.b16 %v184, %v183
    %v210 = vpack.c.b16 %v186, %v185
    %v211 = vpack.c.b16 %v188, %v187
    %v212 = vpack.c.b16 %v190, %v189
    %v213 = vpack.c.b16 %v192, %v191
    %v214 = vpack.c.b16 %v194, %v193
    %v215 = vpack.c.b16 %v196, %v195
    %v216 = vpack.c.b16 %v198, %v197
    %v217 = vpack.c.b16 %v200, %v199
    %v218 = vpack.c.b16 %v202, %v201
    %235 = vmatprep.subr.bf16.mxu0 0
    %236 = vmatpush1.bf16.msra.mxu0 %v203
    %237 = vmatprep.subr.bf16.mxu0 0
    %238 = vmatpush1.bf16.msra.mxu0 %v204
    %239 = vmatprep.subr.bf16.mxu0 0
    %240 = vmatpush1.bf16.msra.mxu0 %v205
    %241 = vmatprep.subr.bf16.mxu0 0
    %242 = vmatpush1.bf16.msra.mxu0 %v206
    %243 = vmatprep.subr.bf16.mxu0 0
    %244 = vmatpush1.bf16.msra.mxu0 %v207
    %245 = vmatprep.subr.bf16.mxu0 0
    %246 = vmatpush1.bf16.msra.mxu0 %v208
    %247 = vmatprep.subr.bf16.mxu0 0
    %248 = vmatpush1.bf16.msra.mxu0 %v209
    %249 = vmatprep.subr.bf16.mxu0 0
    %250 = vmatpush1.bf16.msra.mxu0 %v210
    %251 = vmatprep.subr.bf16.mxu0 0
    %252 = vmatpush1.bf16.msra.mxu0 %v211
    %253 = vmatprep.subr.bf16.mxu0 0
    %254 = vmatpush1.bf16.msra.mxu0 %v212
    %255 = vmatprep.subr.bf16.mxu0 0
    %256 = vmatpush1.bf16.msra.mxu0 %v213
    %257 = vmatprep.subr.bf16.mxu0 0
    %258 = vmatpush1.bf16.msra.mxu0 %v214
    %259 = vmatprep.subr.bf16.mxu0 0
    %260 = vmatpush1.bf16.msra.mxu0 %v215
    %261 = vmatprep.subr.bf16.mxu0 0
    %262 = vmatpush1.bf16.msra.mxu0 %v216
    %263 = vmatprep.subr.bf16.mxu0 0
    %264 = vmatpush1.bf16.msra.mxu0 %v217
    %265 = vmatprep.subr.bf16.mxu0 0
    %266 = vmatpush1.bf16.msra.mxu0 %v218
    %267 = vmatprep.mubr.bf16.mxu0 %v132
    %268 = vmatmul.mubr.bf16.gmra.mrb[0].mxu0 %v131
    %v269 = vpop.f32.mrb[0].mxu0
    %v270 = vadd.f32 %v137, %v269
    %v271 = vpop.f32.mrb[0].mxu0
    %v272 = vpop.f32.mrb[0].mxu0
    %v273 = vpop.f32.mrb[0].mxu0
    %274 = vdwg.mxu0
    %275 = vst [vmem:[#allocation2] sm:$0x3] %v270
    %v276 = vld [vmem:[%s1] sm:$0x3f]
    %v278 = vcombine.high %v276, %v276
    %v280 = vunpack.c.l.s4 1983009808
    %v281 = vunpack.c.0.s8 %v280
    %v282 = vlaneseq
    %v283 = vshrl.u32 %v282, 7
    %v284 = vsub.s32 %v281, %v283
    %v285 = vrot.slane %v276, %v284
    %v287 = vunpack.c.l.s4 1983009808
    %v288 = vunpack.c.0.s8 %v287
    %v289 = vlaneseq
    %v290 = vshrl.u32 %v289, 7
    %v291 = vsub.s32 %v288, %v290
    %v292 = vrot.slane %v278, %v291
    %v293 = vcombine.high %v285, %v285
    %v297 = vpack.c.bf16 %v285, %v285
    %v298 = vpack.c.bf16 %v293, %v293
    %v299 = vpack.c.bf16 %v292, %v292
    %v301 = vlaneseq
    %v302 = vshrl.u32 %v301, 7
    %v303 = vsub.s32 0, %v302
    %v304 = vrot.slane %v118, %v303
    %v354 = vunpack.c.l.b16 %v69
    %v355 = vunpack.c.l.b16 %v70
    %v356 = vunpack.c.l.b16 %v71
    %v357 = vunpack.c.l.b16 %v72
    %v358 = vunpack.c.l.b16 %v73
    %v359 = vunpack.c.l.b16 %v74
    %v360 = vunpack.c.l.b16 %v75
    %v361 = vunpack.c.l.b16 %v76
    %v362 = vunpack.c.l.b16 %v77
    %v363 = vunpack.c.l.b16 %v78
    %v364 = vunpack.c.l.b16 %v79
    %v365 = vunpack.c.l.b16 %v80
    %v366 = vunpack.c.l.b16 %v81
    %v367 = vunpack.c.l.b16 %v82
    %v368 = vunpack.c.l.b16 %v83
    %v369 = vunpack.c.l.b16 %v84
    %v370 = vunpack.c.l.b16 %v85
    %v371 = vunpack.c.l.b16 %v86
    %v372 = vunpack.c.l.b16 %v87
    %v373 = vunpack.c.l.b16 %v88
    %v374 = vunpack.c.l.b16 %v89
    %v375 = vunpack.c.l.b16 %v90
    %v376 = vunpack.c.l.b16 %v91
    %v377 = vunpack.c.l.b16 %v92
    %v378 = vunpack.c.l.b16 %v93
    %v379 = vunpack.c.l.b16 %v94
    %v380 = vunpack.c.l.b16 %v95
    %v381 = vunpack.c.l.b16 %v96
    %v382 = vunpack.c.l.b16 %v97
    %v383 = vunpack.c.l.b16 %v98
    %v384 = vunpack.c.l.b16 %v99
    %v385 = vunpack.c.l.b16 %v100
    %v386 = vunpack.c.l.b16 %v101
    %v387 = vunpack.c.l.b16 %v102
    %v388 = vunpack.c.l.b16 %v103
    %v389 = vunpack.c.l.b16 %v104
    %v390 = vunpack.c.l.b16 %v105
    %v391 = vunpack.c.l.b16 %v106
    %v392 = vunpack.c.l.b16 %v107
    %v393 = vunpack.c.l.b16 %v108
    %v394 = vunpack.c.l.b16 %v109
    %v395 = vunpack.c.l.b16 %v110
    %v396 = vunpack.c.l.b16 %v111
    %v397 = vunpack.c.l.b16 %v112
    %v398 = vunpack.c.l.b16 %v113
    %v399 = vunpack.c.l.b16 %v114
    %v400 = vunpack.c.l.b16 %v115
    %v401 = vunpack.c.l.b16 %v116
    %v402 = vpack.c.b16 %v355, %v354
    %v403 = vpack.c.b16 %v357, %v356
    %v404 = vpack.c.b16 %v359, %v358
    %v405 = vpack.c.b16 %v361, %v360
    %v406 = vpack.c.b16 %v363, %v362
    %v407 = vpack.c.b16 %v365, %v364
    %v408 = vpack.c.b16 %v367, %v366
    %v409 = vpack.c.b16 %v369, %v368
    %v410 = vpack.c.b16 %v371, %v370
    %v411 = vpack.c.b16 %v373, %v372
    %v412 = vpack.c.b16 %v375, %v374
    %v413 = vpack.c.b16 %v377, %v376
    %v414 = vpack.c.b16 %v379, %v378
    %v415 = vpack.c.b16 %v381, %v380
    %v416 = vpack.c.b16 %v383, %v382
    %v417 = vpack.c.b16 %v385, %v384
    %v418 = vpack.c.b16 %v387, %v386
    %v419 = vpack.c.b16 %v389, %v388
    %v420 = vpack.c.b16 %v391, %v390
    %v421 = vpack.c.b16 %v393, %v392
    %v422 = vpack.c.b16 %v395, %v394
    %v423 = vpack.c.b16 %v397, %v396
    %v424 = vpack.c.b16 %v399, %v398
    %v425 = vpack.c.b16 %v401, %v400
    %450 = vmatprep.subr.bf16.mxu0 0
    %451 = vmatpush1.bf16.msra.mxu0 %v402
    %452 = vmatprep.subr.bf16.mxu0 0
    %453 = vmatpush1.bf16.msra.mxu0 %v403
    %454 = vmatprep.subr.bf16.mxu0 0
    %455 = vmatpush1.bf16.msra.mxu0 %v404
    %456 = vmatprep.subr.bf16.mxu0 0
    %457 = vmatpush1.bf16.msra.mxu0 %v405
    %458 = vmatprep.subr.bf16.mxu0 0
    %459 = vmatpush1.bf16.msra.mxu0 %v406
    %460 = vmatprep.subr.bf16.mxu0 0
    %461 = vmatpush1.bf16.msra.mxu0 %v407
    %462 = vmatprep.subr.bf16.mxu0 0
    %463 = vmatpush1.bf16.msra.mxu0 %v408
    %464 = vmatprep.subr.bf16.mxu0 0
    %465 = vmatpush1.bf16.msra.mxu0 %v409
    %466 = vmatprep.subr.bf16.mxu0 0
    %467 = vmatpush1.bf16.msra.mxu0 %v410
    %468 = vmatprep.subr.bf16.mxu0 0
    %469 = vmatpush1.bf16.msra.mxu0 %v411
    %470 = vmatprep.subr.bf16.mxu0 0
    %471 = vmatpush1.bf16.msra.mxu0 %v412
    %472 = vmatprep.subr.bf16.mxu0 0
    %473 = vmatpush1.bf16.msra.mxu0 %v413
    %474 = vmatprep.subr.bf16.mxu0 0
    %475 = vmatpush1.bf16.msra.mxu0 %v414
    %476 = vmatprep.subr.bf16.mxu0 0
    %477 = vmatpush1.bf16.msra.mxu0 %v415
    %478 = vmatprep.subr.bf16.mxu0 0
    %479 = vmatpush1.bf16.msra.mxu0 %v416
    %480 = vmatprep.subr.bf16.mxu0 0
    %481 = vmatpush1.bf16.msra.mxu0 %v417
    %482 = vmatprep.mubr.bf16.mxu0 %v298
    %483 = vmatmul.mubr.bf16.gmra.mrb[0].mxu0 %v297
    %v484 = vpop.f32.mrb[0].mxu0
    %v485 = vadd.f32 %v304, %v484
    %v486 = vpop.f32.mrb[0].mxu0
    %v487 = vpop.f32.mrb[0].mxu0
    %v488 = vpop.f32.mrb[0].mxu0
    %489 = vdwg.mxu0
    %490 = vmatprep.subr.bf16.mxu0 0
    %491 = vmatpush1.bf16.msra.mxu0 %v418
    %492 = vmatprep.subr.bf16.mxu0 0
    %493 = vmatpush1.bf16.msra.mxu0 %v419
    %494 = vmatprep.subr.bf16.mxu0 0
    %495 = vmatpush1.bf16.msra.mxu0 %v420
    %496 = vmatprep.subr.bf16.mxu0 0
    %497 = vmatpush1.bf16.msra.mxu0 %v421
    %498 = vmatprep.subr.bf16.mxu0 0
    %499 = vmatpush1.bf16.msra.mxu0 %v422
    %500 = vmatprep.subr.bf16.mxu0 0
    %501 = vmatpush1.bf16.msra.mxu0 %v423
    %502 = vmatprep.subr.bf16.mxu0 0
    %503 = vmatpush1.bf16.msra.mxu0 %v424
    %504 = vmatprep.subr.bf16.mxu0 0
    %505 = vmatpush1.bf16.msra.mxu0 %v425
    %506 = vmatprep.subr.bf16.mxu0 0
    %507 = vmatpush1.bf16.msra.mxu0 0
    %508 = vmatprep.subr.bf16.mxu0 0
    %509 = vmatpush1.bf16.msra.mxu0 0
    %510 = vmatprep.subr.bf16.mxu0 0
    %511 = vmatpush1.bf16.msra.mxu0 0
    %512 = vmatprep.subr.bf16.mxu0 0
    %513 = vmatpush1.bf16.msra.mxu0 0
    %514 = vmatprep.subr.bf16.mxu0 0
    %515 = vmatpush1.bf16.msra.mxu0 0
    %516 = vmatprep.subr.bf16.mxu0 0
    %517 = vmatpush1.bf16.msra.mxu0 0
    %518 = vmatprep.subr.bf16.mxu0 0
    %519 = vmatpush1.bf16.msra.mxu0 0
    %520 = vmatprep.subr.bf16.mxu0 0
    %521 = vmatpush1.bf16.msra.mxu0 0
    %522 = vmatprep.mubr.bf16.mxu0 0
    %523 = vmatmul.mubr.bf16.gmra.mrb[0].mxu0 %v299
    %v524 = vpop.f32.mrb[0].mxu0
    %v525 = vadd.f32 %v485, %v524
    %v526 = vpop.f32.mrb[0].mxu0
    %v527 = vpop.f32.mrb[0].mxu0
    %v528 = vpop.f32.mrb[0].mxu0
    %529 = vdwg.mxu0
    %530 = vst [vmem:[#allocation4] sm:$0x3] %v525
    %v531 = vld [vmem:[%s2] sm:$0xf]
    %v534 = vunpack.c.l.s4 1983009808
    %v535 = vunpack.c.0.s8 %v534
    %v536 = vlaneseq
    %v537 = vshrl.u32 %v536, 7
    %v538 = vsub.s32 %v535, %v537
    %v539 = vrot.slane %v531, %v538
    %v540 = vcombine.high %v539, %v539
    %v543 = vpack.c.bf16 %v539, %v539
    %v544 = vpack.c.bf16 %v540, %v540
    %545 = vmatprep.subr.bf16.mxu0 0
    %546 = vmatpush1.bf16.msra.mxu0 %v203
    %547 = vmatprep.subr.bf16.mxu0 0
    %548 = vmatpush1.bf16.msra.mxu0 %v204
    %549 = vmatprep.subr.bf16.mxu0 0
    %550 = vmatpush1.bf16.msra.mxu0 %v205
    %551 = vmatprep.subr.bf16.mxu0 0
    %552 = vmatpush1.bf16.msra.mxu0 %v206
    %553 = vmatprep.subr.bf16.mxu0 0
    %554 = vmatpush1.bf16.msra.mxu0 %v207
    %555 = vmatprep.subr.bf16.mxu0 0
    %556 = vmatpush1.bf16.msra.mxu0 %v208
    %557 = vmatprep.subr.bf16.mxu0 0
    %558 = vmatpush1.bf16.msra.mxu0 %v209
    %559 = vmatprep.subr.bf16.mxu0 0
    %560 = vmatpush1.bf16.msra.mxu0 %v210
    %561 = vmatprep.subr.bf16.mxu0 0
    %562 = vmatpush1.bf16.msra.mxu0 %v211
    %563 = vmatprep.subr.bf16.mxu0 0
    %564 = vmatpush1.bf16.msra.mxu0 %v212
    %565 = vmatprep.subr.bf16.mxu0 0
    %566 = vmatpush1.bf16.msra.mxu0 %v213
    %567 = vmatprep.subr.bf16.mxu0 0
    %568 = vmatpush1.bf16.msra.mxu0 %v214
    %569 = vmatprep.subr.bf16.mxu0 0
    %570 = vmatpush1.bf16.msra.mxu0 %v215
    %571 = vmatprep.subr.bf16.mxu0 0
    %572 = vmatpush1.bf16.msra.mxu0 %v216
    %573 = vmatprep.subr.bf16.mxu0 0
    %574 = vmatpush1.bf16.msra.mxu0 %v217
    %575 = vmatprep.subr.bf16.mxu0 0
    %576 = vmatpush1.bf16.msra.mxu0 %v218
    %577 = vmatprep.mubr.bf16.mxu0 %v544
    %578 = vmatmul.mubr.bf16.gmra.mrb[0].mxu0 %v543
    %v579 = vpop.f32.mrb[0].mxu0
    %v580 = vadd.f32 %v137, %v579
    %v581 = vpop.f32.mrb[0].mxu0
    %v582 = vpop.f32.mrb[0].mxu0
    %v583 = vpop.f32.mrb[0].mxu0
    %584 = vdwg.mxu0
    %585 = vst [vmem:[#allocation6] sm:$0x3] %v580
    %v586 = vld [vmem:[%s3] sm:$0x3f]
    %v588 = vcombine.high %v586, %v586
    %v590 = vunpack.c.l.s4 1983009808
    %v591 = vunpack.c.0.s8 %v590
    %v592 = vlaneseq
    %v593 = vshrl.u32 %v592, 7
    %v594 = vsub.s32 %v591, %v593
    %v595 = vrot.slane %v586, %v594
    %v597 = vunpack.c.l.s4 1983009808
    %v598 = vunpack.c.0.s8 %v597
    %v599 = vlaneseq
    %v600 = vshrl.u32 %v599, 7
    %v601 = vsub.s32 %v598, %v600
    %v602 = vrot.slane %v588, %v601
    %v603 = vcombine.high %v595, %v595
    %v607 = vpack.c.bf16 %v595, %v595
    %v608 = vpack.c.bf16 %v603, %v603
    %v609 = vpack.c.bf16 %v602, %v602
    %610 = vmatprep.subr.bf16.mxu0 0
    %611 = vmatpush1.bf16.msra.mxu0 %v402
    %612 = vmatprep.subr.bf16.mxu0 0
    %613 = vmatpush1.bf16.msra.mxu0 %v403
    %614 = vmatprep.subr.bf16.mxu0 0
    %615 = vmatpush1.bf16.msra.mxu0 %v404
    %616 = vmatprep.subr.bf16.mxu0 0
    %617 = vmatpush1.bf16.msra.mxu0 %v405
    %618 = vmatprep.subr.bf16.mxu0 0
    %619 = vmatpush1.bf16.msra.mxu0 %v406
    %620 = vmatprep.subr.bf16.mxu0 0
    %621 = vmatpush1.bf16.msra.mxu0 %v407
    %622 = vmatprep.subr.bf16.mxu0 0
    %623 = vmatpush1.bf16.msra.mxu0 %v408
    %624 = vmatprep.subr.bf16.mxu0 0
    %625 = vmatpush1.bf16.msra.mxu0 %v409
    %626 = vmatprep.subr.bf16.mxu0 0
    %627 = vmatpush1.bf16.msra.mxu0 %v410
    %628 = vmatprep.subr.bf16.mxu0 0
    %629 = vmatpush1.bf16.msra.mxu0 %v411
    %630 = vmatprep.subr.bf16.mxu0 0
    %631 = vmatpush1.bf16.msra.mxu0 %v412
    %632 = vmatprep.subr.bf16.mxu0 0
    %633 = vmatpush1.bf16.msra.mxu0 %v413
    %634 = vmatprep.subr.bf16.mxu0 0
    %635 = vmatpush1.bf16.msra.mxu0 %v414
    %636 = vmatprep.subr.bf16.mxu0 0
    %637 = vmatpush1.bf16.msra.mxu0 %v415
    %638 = vmatprep.subr.bf16.mxu0 0
    %639 = vmatpush1.bf16.msra.mxu0 %v416
    %640 = vmatprep.subr.bf16.mxu0 0
    %641 = vmatpush1.bf16.msra.mxu0 %v417
    %642 = vmatprep.mubr.bf16.mxu0 %v608
    %643 = vmatmul.mubr.bf16.gmra.mrb[0].mxu0 %v607
    %v644 = vpop.f32.mrb[0].mxu0
    %v645 = vadd.f32 %v304, %v644
    %v646 = vpop.f32.mrb[0].mxu0
    %v647 = vpop.f32.mrb[0].mxu0
    %v648 = vpop.f32.mrb[0].mxu0
    %649 = vdwg.mxu0
    %650 = vmatprep.subr.bf16.mxu0 0
    %651 = vmatpush1.bf16.msra.mxu0 %v418
    %652 = vmatprep.subr.bf16.mxu0 0
    %653 = vmatpush1.bf16.msra.mxu0 %v419
    %654 = vmatprep.subr.bf16.mxu0 0
    %655 = vmatpush1.bf16.msra.mxu0 %v420
    %656 = vmatprep.subr.bf16.mxu0 0
    %657 = vmatpush1.bf16.msra.mxu0 %v421
    %658 = vmatprep.subr.bf16.mxu0 0
    %659 = vmatpush1.bf16.msra.mxu0 %v422
    %660 = vmatprep.subr.bf16.mxu0 0
    %661 = vmatpush1.bf16.msra.mxu0 %v423
    %662 = vmatprep.subr.bf16.mxu0 0
    %663 = vmatpush1.bf16.msra.mxu0 %v424
    %664 = vmatprep.subr.bf16.mxu0 0
    %665 = vmatpush1.bf16.msra.mxu0 %v425
    %666 = vmatprep.subr.bf16.mxu0 0
    %667 = vmatpush1.bf16.msra.mxu0 0
    %668 = vmatprep.subr.bf16.mxu0 0
    %669 = vmatpush1.bf16.msra.mxu0 0
    %670 = vmatprep.subr.bf16.mxu0 0
    %671 = vmatpush1.bf16.msra.mxu0 0
    %672 = vmatprep.subr.bf16.mxu0 0
    %673 = vmatpush1.bf16.msra.mxu0 0
    %674 = vmatprep.subr.bf16.mxu0 0
    %675 = vmatpush1.bf16.msra.mxu0 0
    %676 = vmatprep.subr.bf16.mxu0 0
    %677 = vmatpush1.bf16.msra.mxu0 0
    %678 = vmatprep.subr.bf16.mxu0 0
    %679 = vmatpush1.bf16.msra.mxu0 0
    %680 = vmatprep.subr.bf16.mxu0 0
    %681 = vmatpush1.bf16.msra.mxu0 0
    %682 = vmatprep.mubr.bf16.mxu0 0
    %683 = vmatmul.mubr.bf16.gmra.mrb[0].mxu0 %v609
    %v684 = vpop.f32.mrb[0].mxu0
    %v685 = vadd.f32 %v645, %v684
    %v686 = vpop.f32.mrb[0].mxu0
    %v687 = vpop.f32.mrb[0].mxu0
    %v688 = vpop.f32.mrb[0].mxu0
    %689 = vdwg.mxu0
    %690 = vst [vmem:[#allocation7] sm:$0x3] %v685
    // Predicated region
    $region34: #{_contrastive_forward.1} parent=1 // pred_check
      _
    $region35: #{_contrastive_forward.1} parent=1 // pred_check_branch
      %692 = sbr.rel (0) target = $region37
    $region36: #{_contrastive_forward.1} parent=1 // pred_region
      %s694 = ssub.s32 32, 32
      %695 = vsyncadd [#allocation3], %s694
      %s697 = sshll.u32 [#allocation2], 4
      %s698 = int_to_ptr.vmem [resolvable:$true] %s697
      %700 = dma.vmem_to_hbm [thread:$0]  %s698, 32, %s8, [#allocation3]
    $region37: #{_contrastive_forward.1} parent=1 // pred_fallthru
      _
    // Predicated region
    $region38: #{_contrastive_forward.1} parent=1 // pred_check
      _
    $region39: #{_contrastive_forward.1} parent=1 // pred_check_branch
      %702 = sbr.rel (0) target = $region41
    $region40: #{_contrastive_forward.1} parent=1 // pred_region
      %s704 = ssub.s32 32, 32
      %705 = vsyncadd [#allocation5], %s704
      %s707 = sshll.u32 [#allocation4], 4
      %s708 = int_to_ptr.vmem [resolvable:$true] %s707
      %710 = dma.vmem_to_hbm [thread:$0]  %s708, 32, %s9, [#allocation5]
    $region41: #{_contrastive_forward.1} parent=1 // pred_fallthru
      _
    // Predicated region
    $region42: #{_contrastive_forward.1} parent=1 // pred_check
      _
    $region43: #{_contrastive_forward.1} parent=1 // pred_check_branch
      %712 = sbr.rel (0) target = $region45
    $region44: #{_contrastive_forward.1} parent=1 // pred_region
      %s714 = ssub.s32 32, 32
      %715 = vsyncadd [#allocation5], %s714
      %s717 = sshll.u32 [#allocation6], 4
      %s718 = int_to_ptr.vmem [resolvable:$true] %s717
      %720 = dma.vmem_to_hbm [thread:$0]  %s718, 32, %s10, [#allocation5]
    $region45: #{_contrastive_forward.1} parent=1 // pred_fallthru
      _
    // Predicated region
    $region46: #{_contrastive_forward.1} parent=1 // pred_check
      _
    $region47: #{_contrastive_forward.1} parent=1 // pred_check_branch
      %722 = sbr.rel (0) target = $region49
    $region48: #{_contrastive_forward.1} parent=1 // pred_region
      %s724 = ssub.s32 32, 32
      %725 = vsyncadd [#allocation8], %s724
      %s727 = sshll.u32 [#allocation7], 4
      %s728 = int_to_ptr.vmem [resolvable:$true] %s727
      %730 = dma.vmem_to_hbm [thread:$0]  %s728, 32, %s11, [#allocation8]
    $region49: #{_contrastive_forward.1} parent=1 // pred_fallthru
      _
    // Predicated region
    $region50: #{_contrastive_forward.1} parent=1 // pred_check
      _
    $region51: #{_contrastive_forward.1} parent=1 // pred_check_branch
      %732 = sbr.rel (0) target = $region53
    $region52: #{_contrastive_forward.1} parent=1 // pred_region
      %733 = dma.done [#allocation3], 32
    $region53: #{_contrastive_forward.1} parent=1 // pred_fallthru
      _
    // Predicated region
    $region54: #{_contrastive_forward.1} parent=1 // pred_check
      _
    $region55: #{_contrastive_forward.1} parent=1 // pred_check_branch
      %735 = sbr.rel (0) target = $region57
    $region56: #{_contrastive_forward.1} parent=1 // pred_region
      %736 = dma.done [#allocation5], 32
    $region57: #{_contrastive_forward.1} parent=1 // pred_fallthru
      _
    // Predicated region
    $region58: #{_contrastive_forward.1} parent=1 // pred_check
      _
    $region59: #{_contrastive_forward.1} parent=1 // pred_check_branch
      %738 = sbr.rel (0) target = $region61
    $region60: #{_contrastive_forward.1} parent=1 // pred_region
      %739 = dma.done [#allocation5], 32
    $region61: #{_contrastive_forward.1} parent=1 // pred_fallthru
      _
    // Predicated region
    $region62: #{_contrastive_forward.1} parent=1 // pred_check
      _
    $region63: #{_contrastive_forward.1} parent=1 // pred_check_branch
      %741 = sbr.rel (0) target = $region65
    $region64: #{_contrastive_forward.1} parent=1 // pred_region
      %742 = dma.done [#allocation8], 32
    $region65: #{_contrastive_forward.1} parent=1 // pred_fallthru
      _
    %743 = vsyncpa [#allocation3], 1
    %744 = vsyncpa [#allocation5], 1
    %745 = vsyncpa [#allocation8], 1

</llo_original>
